<compile_context>
chip_gen: v5e
topology: v5e:2x2
jax: 0.10.0
libtpu: 0.0.40
codegen_flags: <defaults>
</compile_context>

<pallas_src>
import jax
import jax.numpy as jnp
from jax.experimental import pallas as pl
from jax.experimental.pallas import tpu as pltpu


def mlp_kernel(x_ref, w1_ref, b1_ref, w2_ref, b2_ref, o_ref):
    x = x_ref[...].astype(jnp.float32)   # (1, TILE_N)   batch on lanes
    w1 = w1_ref[...]                     # (H, 1)        hidden on sublanes
    b1 = b1_ref[...]                     # (H, 1)
    w2 = w2_ref[...]                     # (H, 1)

    # Layer 1: rank-1 outer product + bias on the VPU -> (H, TILE_N).
    pre = w1 * x + b1
    # Softplus, stable 2-temp form: max(z,0) + log1p(exp(-|z|)).
    # Numerically identical to torch.nn.Softplus (beta=1, threshold=20) at f32.
    sp = jnp.maximum(pre, 0.0) + jnp.log1p(jnp.exp(-jnp.abs(pre)))
    # Layer 2: contraction over H = sublane (axis 0) reduce; stays lane-dense.
    out = jnp.sum(sp * w2, axis=0, keepdims=True) + b2_ref[0, 0]
    o_ref[...] = out.astype(o_ref.dtype)


def _pick_tile_n(h, n):
    """Pick a lane-tile size: big (amortize grid overhead) but VMEM-safe for all gens."""
    # Budget the (H, TILE_N) f32 softplus-chain intermediates (~8 live temps plus
    # double-buffered I/O tiles) at ~12 MiB: safe under v5e's 16 MiB scoped-VMEM
    # default and v6e/v7x's 32 MiB (v7x physical VMEM is only 64 MiB).
    budget_bytes = 12 * 1024 * 1024
    live_temps = 8
    by_vmem = budget_bytes // (live_temps * 4 * max(int(h), 1))
    by_vmem = max(128, (by_vmem // 128) * 128)
    n128 = 128 * pl.cdiv(n, 128)          # lane-rounded batch
    return max(128, min(8192, by_vmem, n128))


def _batch_dim_semantics():
    """Shard the batch grid across both TensorCores on v7x; plain parallel elsewhere."""
    try:
        kind = jax.devices()[0].device_kind.lower()
    except Exception:
        kind = ""
    if "v7" in kind or "tpu7" in kind:
        return (pltpu.CORE_PARALLEL,)
    return ("parallel",)


def neural_net_forward(x, w1, b1, w2, b2, *, tile_n=None):
    """x: (N,1); w1: (H,1); b1: (H,); w2: (1,H); b2: (1,)  -- PyTorch param shapes."""
    n = x.shape[0]
    h = w1.shape[0]
    out_dtype = x.dtype

    if tile_n is None:
        tile_n = _pick_tile_n(h, n)
    n128 = 128 * pl.cdiv(n, 128)
    tile_n = max(128, min(128 * pl.cdiv(tile_n, 128), n128))
    grid = (pl.cdiv(n, tile_n),)

    # Metadata-only reshapes -- no host-side pad / copy of x.
    x_lane = x.reshape(1, n)                        # (1, N)  batch on lanes
    w1_c = w1.reshape(h, 1).astype(jnp.float32)     # (H, 1)
    b1_c = b1.reshape(h, 1).astype(jnp.float32)     # (H, 1)
    w2_c = w2.reshape(h, 1).astype(jnp.float32)     # (H, 1)  ((1,H) row-major == (H,1))
    b2_s = b2.reshape(1, 1).astype(jnp.float32)     # (1, 1)  scalar in SMEM

    out_lane = pl.pallas_call(
        mlp_kernel,
        out_shape=jax.ShapeDtypeStruct((1, n), out_dtype),
        grid=grid,
        in_specs=[
            pl.BlockSpec((1, tile_n), lambda i: (0, i)),          # x tile (lane-dense)
            pl.BlockSpec((h, 1), lambda i: (0, 0)),               # w1 (resident)
            pl.BlockSpec((h, 1), lambda i: (0, 0)),               # b1 (resident)
            pl.BlockSpec((h, 1), lambda i: (0, 0)),               # w2 (resident)
            pl.BlockSpec(memory_space=pltpu.MemorySpace.SMEM),    # b2 scalar
        ],
        out_specs=pl.BlockSpec((1, tile_n), lambda i: (0, i)),
        compiler_params=pltpu.CompilerParams(
            dimension_semantics=_batch_dim_semantics(),
        ),
    )(x_lane, w1_c, b1_c, w2_c, b2_s)

    # Back to PyTorch layout (N, 1); metadata-only reshape, no slice copy.
    return out_lane.reshape(n, 1)


def init_params(key, hidden_size):
    """Matches PyTorch nn.Linear default init: U(-1/sqrt(fan_in), 1/sqrt(fan_in))."""
    k1, k2, k3, k4 = jax.random.split(key, 4)
    bound1 = 1.0 / jnp.sqrt(1.0)           # fan_in = 1
    bound2 = 1.0 / jnp.sqrt(hidden_size)   # fan_in = hidden_size
    w1 = jax.random.uniform(k1, (hidden_size, 1), jnp.float32, -bound1, bound1)
    b1 = jax.random.uniform(k2, (hidden_size,), jnp.float32, -bound1, bound1)
    w2 = jax.random.uniform(k3, (1, hidden_size), jnp.float32, -bound2, bound2)
    b2 = jax.random.uniform(k4, (1,), jnp.float32, -bound2, bound2)
    return w1, b1, w2, b2


def _softplus_ref(x):
    # PyTorch nn.Softplus (beta=1, threshold=20) reference semantics.
    return jnp.where(x > 20.0, x, jnp.log1p(jnp.exp(jnp.minimum(x, 20.0))))


def _reference(x, w1, b1, w2, b2):
    return _softplus_ref(x @ w1.T + b1) @ w2.T + b2


if __name__ == "__main__":
    key = jax.random.PRNGKey(0)
    k_x, k_x2, k_p = jax.random.split(key, 3)

    hidden = 32
    w1, b1, w2, b2 = init_params(k_p, hidden)

    # Small case: single (partial) 128-lane tile, no padding anywhere.
    x_small = jax.random.normal(k_x, (8, 1), dtype=jnp.float32)
    out_small = jax.block_until_ready(neural_net_forward(x_small, w1, b1, w2, b2))
    ref_small = _reference(x_small, w1, b1, w2, b2)
    assert out_small.shape == (8, 1)
    assert jnp.allclose(out_small, ref_small, atol=1e-5, rtol=1e-5)

    # Larger, non-multiple-of-128 batch with the auto tile size (single big tile).
    x_big = jax.random.normal(k_x2, (1000, 1), dtype=jnp.float32)
    out_big = jax.block_until_ready(neural_net_forward(x_big, w1, b1, w2, b2))
    ref_big = _reference(x_big, w1, b1, w2, b2)
    assert out_big.shape == (1000, 1)
    assert jnp.allclose(out_big, ref_big, atol=1e-5, rtol=1e-5)

    # Same batch with a small forced tile: exercises a multi-step grid with a
    # masked partial last block (garbage lanes read but never stored).
    out_tiled = jax.block_until_ready(
        neural_net_forward(x_big, w1, b1, w2, b2, tile_n=128))
    assert out_tiled.shape == (1000, 1)
    assert jnp.allclose(out_tiled, ref_big, atol=1e-5, rtol=1e-5)

    print("KERNEL_OK")
</pallas_src>

<mosaic_0001>
module attributes {stable_mosaic.version = 11 : i64} {
  func.func @mlp_kernel(%arg0: i32, %arg1: memref<1x128xf32, #tpu.memory_space<vmem>>, %arg2: memref<32x1xf32, #tpu.memory_space<vmem>>, %arg3: memref<32x1xf32, #tpu.memory_space<vmem>>, %arg4: memref<32x1xf32, #tpu.memory_space<vmem>>, %arg5: memref<1x1xf32, #tpu.memory_space<smem>>, %arg6: memref<1x128xf32, #tpu.memory_space<vmem>>) attributes {dimension_semantics = [#tpu.dimension_semantics<parallel>], iteration_bounds = array<i64: 1>, scalar_prefetch = 0 : i64, scratch_operands = 0 : i64, tpu.core_type = #tpu.core_type<tc>, window_params = [{transform_indices = @transform_0, window_bounds = array<i64: 1, 128>}, {pipeline_mode = #tpu.pipeline_mode<synchronous>, transform_indices = @transform_1, window_bounds = array<i64: 32, 1>}, {pipeline_mode = #tpu.pipeline_mode<synchronous>, transform_indices = @transform_2, window_bounds = array<i64: 32, 1>}, {pipeline_mode = #tpu.pipeline_mode<synchronous>, transform_indices = @transform_3, window_bounds = array<i64: 32, 1>}, {transform_indices = @transform_4, window_bounds = array<i64: 1, 1>}, {transform_indices = @transform_5, window_bounds = array<i64: 1, 128>}]} {
    %c0 = arith.constant 0 : index
    %c0_0 = arith.constant 0 : index
    %0 = vector.load %arg1[%c0, %c0_0] : memref<1x128xf32, #tpu.memory_space<vmem>>, vector<1x128xf32>
    %c0_1 = arith.constant 0 : index
    %c0_2 = arith.constant 0 : index
    %1 = vector.load %arg2[%c0_1, %c0_2] : memref<32x1xf32, #tpu.memory_space<vmem>>, vector<32x1xf32>
    %c0_3 = arith.constant 0 : index
    %c0_4 = arith.constant 0 : index
    %2 = vector.load %arg3[%c0_3, %c0_4] : memref<32x1xf32, #tpu.memory_space<vmem>>, vector<32x1xf32>
    %c0_5 = arith.constant 0 : index
    %c0_6 = arith.constant 0 : index
    %3 = vector.load %arg4[%c0_5, %c0_6] : memref<32x1xf32, #tpu.memory_space<vmem>>, vector<32x1xf32>
    %4 = vector.broadcast %1 : vector<32x1xf32> to vector<32x128xf32>
    %5 = vector.broadcast %0 : vector<1x128xf32> to vector<32x128xf32>
    %6 = arith.mulf %4, %5 : vector<32x128xf32>
    %7 = vector.broadcast %2 : vector<32x1xf32> to vector<32x128xf32>
    %8 = arith.addf %6, %7 : vector<32x128xf32>
    %cst = arith.constant 0.000000e+00 : f32
    %9 = vector.broadcast %cst : f32 to vector<32x128xf32>
    %10 = arith.maximumf %8, %9 : vector<32x128xf32>
    %11 = math.absf %8 : vector<32x128xf32>
    %cst_7 = arith.constant 0.000000e+00 : f32
    %12 = vector.broadcast %cst_7 : f32 to vector<32x128xf32>
    %13 = arith.subf %12, %11 : vector<32x128xf32>
    %14 = math.exp %13 : vector<32x128xf32>
    %15 = math.log1p %14 : vector<32x128xf32>
    %16 = arith.addf %10, %15 : vector<32x128xf32>
    %17 = vector.broadcast %3 : vector<32x1xf32> to vector<32x128xf32>
    %18 = arith.mulf %16, %17 : vector<32x128xf32>
    %cst_8 = arith.constant dense<0.000000e+00> : vector<128xf32>
    %19 = vector.multi_reduction <add>, %18, %cst_8 [0] : vector<32x128xf32> to vector<128xf32>
    %20 = vector.shape_cast %19 : vector<128xf32> to vector<1x128xf32>
    %c0_9 = arith.constant 0 : index
    %c0_10 = arith.constant 0 : index
    %21 = memref.load %arg5[%c0_9, %c0_10] : memref<1x1xf32, #tpu.memory_space<smem>>
    %22 = vector.broadcast %21 : f32 to vector<1x128xf32>
    %23 = arith.addf %20, %22 : vector<1x128xf32>
    %c0_11 = arith.constant 0 : index
    %c0_12 = arith.constant 0 : index
    %24 = vector.load %arg6[%c0_11, %c0_12] : memref<1x128xf32, #tpu.memory_space<vmem>>, vector<1x128xf32>
    tpu.vector_store %arg6[%c0_11, %c0_12], %23 {strides = array<i32>} : memref<1x128xf32, #tpu.memory_space<vmem>>, vector<1x128xf32>,
    return
  }
  func.func @transform_0(%arg0: i32) -> (i32, i32) {
    %c0_i32 = arith.constant 0 : i32
    %c0_i32_0 = arith.constant 0 : i32
    return %c0_i32, %arg0 : i32, i32
  }
  func.func @transform_1(%arg0: i32) -> (i32, i32) {
    %c0_i32 = arith.constant 0 : i32
    %c0_i32_0 = arith.constant 0 : i32
    %c0_i32_1 = arith.constant 0 : i32
    return %c0_i32, %c0_i32_0 : i32, i32
  }
  func.func @transform_2(%arg0: i32) -> (i32, i32) {
    %c0_i32 = arith.constant 0 : i32
    %c0_i32_0 = arith.constant 0 : i32
    %c0_i32_1 = arith.constant 0 : i32
    return %c0_i32, %c0_i32_0 : i32, i32
  }
  func.func @transform_3(%arg0: i32) -> (i32, i32) {
    %c0_i32 = arith.constant 0 : i32
    %c0_i32_0 = arith.constant 0 : i32
    %c0_i32_1 = arith.constant 0 : i32
    return %c0_i32, %c0_i32_0 : i32, i32
  }
  func.func @transform_4(%arg0: i32) -> (i32, i32) {
    %c0_i32 = arith.constant 0 : i32
    %c0_i32_0 = arith.constant 0 : i32
    %c0_i32_1 = arith.constant 0 : i32
    return %c0_i32, %c0_i32_0 : i32, i32
  }
  func.func @transform_5(%arg0: i32) -> (i32, i32) {
    %c0_i32 = arith.constant 0 : i32
    %c0_i32_0 = arith.constant 0 : i32
    return %c0_i32, %arg0 : i32, i32
  }
}

</mosaic_0001>

<llo_original>
// kernel: tpu_custom_call.1
$region0: #{tpu_custom_call.1}
  #allocation0 [shape = 'u32[]', space=smem, size = 0x4, offset = 0x4, fixed_abs, tag = 'smem constant byte address 0x4 - core index']
  #allocation1 [shape = 'u32[72,128]{1,0:T(1,128)}', space=vmem, size = 0x9000, scoped, tag = 'internal scratch']
  #allocation2 [shape = 'f32[1,1]{1,0:T(1,128)S(6)}', space=smem, size = 0x200, scoped, tag = 'scoped memory for tpu_custom_call.1']
  %s0 = inlined_call_operand.vmem [shape: f32[1,8], index: 0, kind: input, shape index: {}]
  %s1 = inlined_call_operand.vmem [shape: f32[32,1], index: 1, kind: input, shape index: {}]
  %s2 = inlined_call_operand.vmem [shape: f32[32,1], index: 2, kind: input, shape index: {}]
  %s3 = inlined_call_operand.vmem [shape: f32[32,1], index: 3, kind: input, shape index: {}]
  %s4 = inlined_call_operand.<no memory space> [shape: f32[1,1], index: 4, kind: input, shape index: {}]
  %s5 = inlined_call_operand.hbm [shape: f32[1,8], index: 5, kind: output, shape index: {}]
  %s6 = sld [smem:[#allocation0]]
  $region30: #{tpu_custom_call.1} parent=0
    _
  %s8 = ssub.s32 1, %s6
  %s9 = scalar_select 0, %s8, %s6
  %10 = sst [smem:[#allocation2]] %s4
  $region1: #{tpu_custom_call.1} parent=0
    #allocation3 [shape = 'u8[512]{0}', space=vmem, size = 0x400, scoped, tag = 'output window, operand 0, single buffered']
    #allocation4 [shape = 's32[1]{0}', space=sflag, size = 0x4, scoped, tag = 'scoped memory for tpu_custom_call.1']
    %11 = vsyncpa [#allocation4], 0
    // Predicated region
    $region2: #{tpu_custom_call.1} parent=1 // pred_check
      _
    $region3: #{tpu_custom_call.1} parent=1 // pred_check_branch
      %13 = sbr.rel (0) target = $region5
    $region4: #{tpu_custom_call.1} parent=1 // pred_region
      _
    $region5: #{tpu_custom_call.1} parent=1 // pred_fallthru
      _
    // Predicated region
    $region6: #{tpu_custom_call.1} parent=1 // pred_check
      _
    $region7: #{tpu_custom_call.1} parent=1 // pred_check_branch
      %15 = sbr.rel (0) target = $region9
    $region8: #{tpu_custom_call.1} parent=1 // pred_region
      _
    $region9: #{tpu_custom_call.1} parent=1 // pred_fallthru
      _
    // Predicated region
    $region10: #{tpu_custom_call.1} parent=1 // pred_check
      _
    $region11: #{tpu_custom_call.1} parent=1 // pred_check_branch
      %17 = sbr.rel (0) target = $region13
    $region12: #{tpu_custom_call.1} parent=1 // pred_region
      _
    $region13: #{tpu_custom_call.1} parent=1 // pred_fallthru
      _
    // Predicated region
    $region14: #{tpu_custom_call.1} parent=1 // pred_check
      _
    $region15: #{tpu_custom_call.1} parent=1 // pred_check_branch
      %19 = sbr.rel (0) target = $region17
    $region16: #{tpu_custom_call.1} parent=1 // pred_region
      _
    $region17: #{tpu_custom_call.1} parent=1 // pred_fallthru
      _
    // Predicated region
    $region18: #{tpu_custom_call.1} parent=1 // pred_check
      _
    $region19: #{tpu_custom_call.1} parent=1 // pred_check_branch
      %21 = sbr.rel (0) target = $region21
    $region20: #{tpu_custom_call.1} parent=1 // pred_region
      _
    $region21: #{tpu_custom_call.1} parent=1 // pred_fallthru
      _
    %v22 = vld [vmem:[%s0] sm:$0x1]
    %v23 = vld [vmem:[%s1] sm:$0xff]
    %v24 = vld [vmem:[%s1 + $0x8] sm:$0xff]
    %v25 = vld [vmem:[%s1 + $0x10] sm:$0xff]
    %v26 = vld [vmem:[%s1 + $0x18] sm:$0xff]
    %v27 = vld [vmem:[%s2] sm:$0xff]
    %v28 = vld [vmem:[%s2 + $0x8] sm:$0xff]
    %v29 = vld [vmem:[%s2 + $0x10] sm:$0xff]
    %v30 = vld [vmem:[%s2 + $0x18] sm:$0xff]
    %v31 = vld [vmem:[%s3] sm:$0xff]
    %v32 = vld [vmem:[%s3 + $0x8] sm:$0xff]
    %v33 = vld [vmem:[%s3 + $0x10] sm:$0xff]
    %v34 = vld [vmem:[%s3 + $0x18] sm:$0xff]
    %36 = vset.pattern.permute.xlu0 0
    %37 = vperm.xlu0 %36, %v23
    %v38 = vpop.permute.xlu0 %37
    %41 = vset.pattern.permute.xlu0 0
    %42 = vperm.xlu0 %41, %v24
    %v43 = vpop.permute.xlu0 %42
    %46 = vset.pattern.permute.xlu0 0
    %47 = vperm.xlu0 %46, %v25
    %v48 = vpop.permute.xlu0 %47
    %51 = vset.pattern.permute.xlu0 0
    %52 = vperm.xlu0 %51, %v26
    %v53 = vpop.permute.xlu0 %52
    %v56 = vperm.slane %v22, 0
    %v58 = vmul.f32 %v38, %v56
    %v59 = vmul.f32 %v43, %v56
    %v60 = vmul.f32 %v48, %v56
    %v61 = vmul.f32 %v53, %v56
    %63 = vset.pattern.permute.xlu0 0
    %64 = vperm.xlu0 %63, %v27
    %v65 = vpop.permute.xlu0 %64
    %68 = vset.pattern.permute.xlu0 0
    %69 = vperm.xlu0 %68, %v28
    %v70 = vpop.permute.xlu0 %69
    %73 = vset.pattern.permute.xlu0 0
    %74 = vperm.xlu0 %73, %v29
    %v75 = vpop.permute.xlu0 %74
    %78 = vset.pattern.permute.xlu0 0
    %79 = vperm.xlu0 %78, %v30
    %v80 = vpop.permute.xlu0 %79
    %v82 = vadd.f32 %v58, %v65
    %v83 = vadd.f32 %v59, %v70
    %v84 = vadd.f32 %v60, %v75
    %v85 = vadd.f32 %v61, %v80
    %v86 = vmax.f32 %v82, 0.0
    %v87 = vmax.f32 %v83, 0.0
    %v88 = vmax.f32 %v84, 0.0
    %v89 = vmax.f32 %v85, 0.0
    %v90 = vand.u32 2147483647, %v82
    %v91 = vand.u32 2147483647, %v83
    %v92 = vand.u32 2147483647, %v84
    %v93 = vand.u32 2147483647, %v85
    %v94 = vsub.f32 0.0, %v90
    %v95 = vsub.f32 0.0, %v91
    %v96 = vsub.f32 0.0, %v92
    %v97 = vsub.f32 0.0, %v93
    %v98 = vmul.f32 %v94, 1.442695
    %v99 = vpow.pop %v98
    %v100 = vmul.f32 %v95, 1.442695
    %v101 = vpow.pop %v100
    %v102 = vmul.f32 %v96, 1.442695
    %v103 = vpow.pop %v102
    %v104 = vmul.f32 %v97, 1.442695
    %v105 = vpow.pop %v104
    %v106 = vadd.f32 %v99, 1.0
    %v107 = vlog2.pop %v106
    %v108 = vmul.f32 %v107, 0.6931472
    %v109 = vmul.f32 -0.5, %v99
    %v110 = vadd.f32 %v109, 1.0
    %v111 = vmul.f32 %v110, %v99
    %v112 = vand.u32 2147483647, %v99
    %vm113 = vcmp.lt.f32.partialorder %v112, 0.0004427343
    %v114 = vsel %vm113, %v111, %v108
    %v115 = vadd.f32 %v101, 1.0
    %v116 = vlog2.pop %v115
    %v117 = vmul.f32 %v116, 0.6931472
    %v118 = vmul.f32 -0.5, %v101
    %v119 = vadd.f32 %v118, 1.0
    %v120 = vmul.f32 %v119, %v101
    %v121 = vand.u32 2147483647, %v101
    %vm122 = vcmp.lt.f32.partialorder %v121, 0.0004427343
    %v123 = vsel %vm122, %v120, %v117
    %v124 = vadd.f32 %v103, 1.0
    %v125 = vlog2.pop %v124
    %v126 = vmul.f32 %v125, 0.6931472
    %v127 = vmul.f32 -0.5, %v103
    %v128 = vadd.f32 %v127, 1.0
    %v129 = vmul.f32 %v128, %v103
    %v130 = vand.u32 2147483647, %v103
    %vm131 = vcmp.lt.f32.partialorder %v130, 0.0004427343
    %v132 = vsel %vm131, %v129, %v126
    %v133 = vadd.f32 %v105, 1.0
    %v134 = vlog2.pop %v133
    %v135 = vmul.f32 %v134, 0.6931472
    %v136 = vmul.f32 -0.5, %v105
    %v137 = vadd.f32 %v136, 1.0
    %v138 = vmul.f32 %v137, %v105
    %v139 = vand.u32 2147483647, %v105
    %vm140 = vcmp.lt.f32.partialorder %v139, 0.0004427343
    %v141 = vsel %vm140, %v138, %v135
    %v142 = vadd.f32 %v86, %v114
    %v143 = vadd.f32 %v87, %v123
    %v144 = vadd.f32 %v88, %v132
    %v145 = vadd.f32 %v89, %v141
    %147 = vset.pattern.permute.xlu0 0
    %148 = vperm.xlu0 %147, %v31
    %v149 = vpop.permute.xlu0 %148
    %152 = vset.pattern.permute.xlu0 0
    %153 = vperm.xlu0 %152, %v32
    %v154 = vpop.permute.xlu0 %153
    %157 = vset.pattern.permute.xlu0 0
    %158 = vperm.xlu0 %157, %v33
    %v159 = vpop.permute.xlu0 %158
    %162 = vset.pattern.permute.xlu0 0
    %163 = vperm.xlu0 %162, %v34
    %v164 = vpop.permute.xlu0 %163
    %v166 = vmul.f32 %v142, %v149
    %v167 = vmul.f32 %v143, %v154
    %v168 = vmul.f32 %v144, %v159
    %v169 = vmul.f32 %v145, %v164
    %v170 = vadd.f32 %v166, %v167
    %v171 = vadd.f32 %v170, %v168
    %v172 = vadd.f32 %v171, %v169
    %v173 = vrot.slane %v172, 4
    %v174 = vadd.f32 %v172, %v173
    %v175 = vrot.slane %v174, 2
    %v176 = vadd.f32 %v174, %v175
    %v177 = vrot.slane %v176, 1
    %v178 = vadd.f32 %v176, %v177
    %s179 = sld [smem:[#allocation2]]
    %v180 = vstv %s179
    %v181 = vadd.f32 %v178, %v180
    %182 = vst [vmem:[#allocation3] sm:$0x1] %v181
    // Predicated region
    $region22: #{tpu_custom_call.1} parent=1 // pred_check
      _
    $region23: #{tpu_custom_call.1} parent=1 // pred_check_branch
      %184 = sbr.rel (0) target = $region25
    $region24: #{tpu_custom_call.1} parent=1 // pred_region
      %186 = vsyncadd [#allocation4], 0
      %s188 = sshll.u32 [#allocation3], 4
      %s189 = int_to_ptr.vmem [resolvable:$true] %s188
      %s190 = sshll.u32 %s5, 4
      %s191 = int_to_ptr.hbm [resolvable:$true] %s190
      %193 = dma.vmem_to_hbm [thread:$0]  %s189, 16, %s191, [#allocation4]
    $region25: #{tpu_custom_call.1} parent=1 // pred_fallthru
      _
    // Predicated region
    $region26: #{tpu_custom_call.1} parent=1 // pred_check
      _
    $region27: #{tpu_custom_call.1} parent=1 // pred_check_branch
      %195 = sbr.rel (0) target = $region29
    $region28: #{tpu_custom_call.1} parent=1 // pred_region
      %197 = dma.done [#allocation4], 16
    $region29: #{tpu_custom_call.1} parent=1 // pred_fallthru
      _
    %198 = vsyncpa [#allocation4], 1

</llo_original>
